<compile_context>
chip_gen: v6e
topology: v6e:2x2x1
jax: 0.10.0
libtpu: 0.0.40
codegen_flags: <defaults>
</compile_context>

<pallas_src>
import functools
import math

import jax
import jax.numpy as jnp
from jax import lax
from jax.experimental import pallas as pl
from jax.experimental.pallas import tpu as pltpu

_LANES = 128
_C = float(math.log(math.expm1(0.098)))  # scalar constant from the torch module
_EPS = 1e-9


def _mape_kernel(dp_ref, jr_ref, dt_ref, jt_ref, outd_ref, outj_ref, *,
                 n_valid, br, blocks_per_core, total_blocks, acc_rows, need_mask):
    c = pl.program_id(0)          # core / parallel axis
    i = pl.program_id(1)          # row-block (reduction) axis
    block_id = c * blocks_per_core + i

    @pl.when(i == 0)
    def _init():
        outd_ref[...] = jnp.zeros_like(outd_ref)
        outj_ref[...] = jnp.zeros_like(outj_ref)

    # The last core may have trailing steps whose index_map was clamped onto the
    # final block; skip accumulation for those duplicated steps.
    @pl.when(block_id < total_blocks)
    def _accum():
        # Load native-dtype tiles, upcast in-kernel (free on VPU; keeps HBM
        # traffic at the input dtype width, e.g. half for bf16 inputs).
        dp = dp_ref[...].astype(jnp.float32)   # delay prediction
        jr = jr_ref[...].astype(jnp.float32)   # raw jitter prediction
        dt = dt_ref[...].astype(jnp.float32)   # delay target
        jt = jt_ref[...].astype(jnp.float32)   # jitter target

        # jitter_pred = (softplus(c + jr) + eps)^2  (stable softplus -> EUP exp/log)
        x = jnp.float32(_C) + jr
        sp = jnp.maximum(x, 0.0) + jnp.log1p(jnp.exp(-jnp.abs(x)))
        jp = (sp + jnp.float32(_EPS)) ** 2

        d_term = jnp.abs(dt - dp) / (dt + jnp.float32(_EPS))
        j_term = jnp.abs(jt - jp) / (jt + jnp.float32(_EPS))

        if need_mask:  # static: only emitted when padded / partial-block tails exist
            row_idx = lax.broadcasted_iota(jnp.int32, (br, _LANES), 0)
            grow = block_id * br + row_idx
            if n_valid % _LANES == 0:
                # lane-aligned B: a single row-index compare suffices
                valid = grow < (n_valid // _LANES)
            else:
                lane_idx = lax.broadcasted_iota(jnp.int32, (br, _LANES), 1)
                # int32 index math: fine for any B < 2^31 elements
                valid = grow * _LANES + lane_idx < n_valid
            d_term = jnp.where(valid, d_term, 0.0)
            j_term = jnp.where(valid, j_term, 0.0)

        if acc_rows == 8:
            # (br,128) -> (br/8, 8, 128) regroups whole sublane tiles (no relayout);
            # the axis-0 sum is pure VALU vreg adds, no XLU sublane reduce per step.
            d_part = d_term.reshape(br // 8, 8, _LANES).sum(axis=0)
            j_part = j_term.reshape(br // 8, 8, _LANES).sum(axis=0)
        else:
            d_part = d_term.sum(axis=0, keepdims=True)
            j_part = j_term.sum(axis=0, keepdims=True)

        # Output block is resident across the reduction axis -> acts as accumulator.
        outd_ref[...] += d_part
        outj_ref[...] += j_part


def mape(y_pred, y, *, block_rows=4096):
    """Pallas implementation of MAPE.forward(y_pred, y) -> (delay_mape, jitter_mape)."""
    B = y_pred.shape[0]

    # Layout prep only; all math happens in the kernel.
    delay_pred = y_pred[:, 0].reshape(-1)   # stride-2 slices (layout is fixed by the spec)
    jitter_raw = y_pred[:, 1].reshape(-1)
    delay_t = y[0].reshape(-1)              # contiguous views
    jitter_t = y[1].reshape(-1)
    assert delay_t.shape[0] == B and jitter_t.shape[0] == B

    rows = -(-B // _LANES)                           # lane-dense row count
    block_rows = max(16, (block_rows // 16) * 16)    # multiple of 16 (bf16 sublane tile)
    br = block_rows if rows >= block_rows else rows  # full-array block for small B
    total_blocks = -(-rows // br)
    num_cores = 2 if total_blocks >= 2 else 1        # v7x: 2 TCs; harmless elsewhere
    blocks_per_core = -(-total_blocks // num_cores)
    acc_rows = 8 if br % 8 == 0 else 1
    need_mask = (total_blocks * br * _LANES) != B

    # Pad only when B is not lane-aligned (<=127 tail elems); partial last blocks
    # are left to Pallas boundary handling + the in-kernel mask (no pad-to-block).
    padded_len = rows * _LANES

    def _prep(v):
        if v.shape[0] != padded_len:
            v = jnp.pad(v, (0, padded_len - v.shape[0]))
        return v.reshape(rows, _LANES)

    dp, jr, dt, jt = (_prep(v) for v in (delay_pred, jitter_raw, delay_t, jitter_t))

    def row_map(c, i):
        # Clamp so the (possibly) over-covering last core never issues an OOB DMA;
        # the duplicated step is skipped inside the kernel.
        return (jnp.minimum(c * blocks_per_core + i, total_blocks - 1), 0)

    in_spec = pl.BlockSpec((br, _LANES), row_map)
    out_spec = pl.BlockSpec((None, acc_rows, _LANES), lambda c, i: (c, 0, 0))

    kernel = functools.partial(
        _mape_kernel, n_valid=B, br=br, blocks_per_core=blocks_per_core,
        total_blocks=total_blocks, acc_rows=acc_rows, need_mask=need_mask)

    acc_shape = jax.ShapeDtypeStruct((num_cores, acc_rows, _LANES), jnp.float32)
    out_d, out_j = pl.pallas_call(
        kernel,
        out_shape=(acc_shape, acc_shape),
        grid_spec=pltpu.PrefetchScalarGridSpec(
            num_scalar_prefetch=0,
            grid=(num_cores, blocks_per_core),
            in_specs=[in_spec, in_spec, in_spec, in_spec],
            out_specs=(out_spec, out_spec),
        ),
        compiler_params=pltpu.CompilerParams(
            dimension_semantics=("parallel", "arbitrary"),   # core split x reduction
            vmem_limit_bytes=32 * 1024 * 1024,               # v5e scoped default is 16 MiB
        ),
    )(dp, jr, dt, jt)

    # Tiny finalize: reduce the per-core (acc_rows, 128) partials and divide by N.
    inv_n = 1.0 / B
    return jnp.sum(out_d) * inv_n, jnp.sum(out_j) * inv_n


if __name__ == "__main__":
    key = jax.random.PRNGKey(0)
    k1, k2 = jax.random.split(key, 2)

    B = 200                                   # batch of (delay, jitter) predictions
    y_pred = jax.random.normal(k1, (B, 2), dtype=jnp.float32)
    # Positive, away-from-zero targets (delay / jitter are physical quantities).
    y = jax.random.uniform(k2, (2, B, 1), dtype=jnp.float32, minval=0.5, maxval=1.5)

    mape_jit = jax.jit(mape)   # lets XLA fuse the slice/pad/reshape prep ops
    delay_mape, jitter_mape = jax.block_until_ready(mape_jit(y_pred, y))

    # Pure-JAX reference mirroring the PyTorch module.
    delay = y_pred[:, 0:1]
    jitter_raw = y_pred[:, 1:2]
    sig = jax.nn.softplus(_C + jitter_raw) + _EPS
    jitter = sig ** 2
    delay_t, jitter_t = y[0], y[1]
    ref_delay = jnp.mean(jnp.abs(delay_t - delay) / (delay_t + _EPS))
    ref_jitter = jnp.mean(jnp.abs(jitter_t - jitter) / (jitter_t + _EPS))

    assert jnp.allclose(delay_mape, ref_delay, rtol=1e-5, atol=1e-6), (delay_mape, ref_delay)
    assert jnp.allclose(jitter_mape, ref_jitter, rtol=1e-5, atol=1e-6), (jitter_mape, ref_jitter)
    print("KERNEL_OK")
</pallas_src>

<mosaic_0001>
module attributes {stable_mosaic.version = 11 : i64} {
  func.func @_mape_kernel(%arg0: i32, %arg1: i32, %arg2: memref<2x128xf32, #tpu.memory_space<vmem>>, %arg3: memref<2x128xf32, #tpu.memory_space<vmem>>, %arg4: memref<2x128xf32, #tpu.memory_space<vmem>>, %arg5: memref<2x128xf32, #tpu.memory_space<vmem>>, %arg6: memref<1x1x128xf32, #tpu.memory_space<vmem>>, %arg7: memref<1x1x128xf32, #tpu.memory_space<vmem>>) attributes {dimension_semantics = [#tpu.dimension_semantics<parallel>, #tpu.dimension_semantics<arbitrary>], iteration_bounds = array<i64: 1, 1>, scalar_prefetch = 0 : i64, scratch_operands = 0 : i64, tpu.core_type = #tpu.core_type<tc>, window_params = [{transform_indices = @transform_0, window_bounds = array<i64: 2, 128>}, {transform_indices = @transform_1, window_bounds = array<i64: 2, 128>}, {transform_indices = @transform_2, window_bounds = array<i64: 2, 128>}, {transform_indices = @transform_3, window_bounds = array<i64: 2, 128>}, {transform_indices = @transform_4, window_bounds = array<i64: 1, 1, 128>}, {transform_indices = @transform_5, window_bounds = array<i64: 1, 1, 128>}]} {
    %c1_i32 = arith.constant 1 : i32
    %0 = arith.muli %arg0, %c1_i32 : i32
    %1 = arith.addi %0, %arg1 : i32
    %c0_i32 = arith.constant 0 : i32
    %2 = arith.cmpi eq, %arg1, %c0_i32 : i32
    %3 = arith.extui %2 : i1 to i32
    %c0_i32_0 = arith.constant 0 : i32
    %4 = arith.cmpi ne, %3, %c0_i32_0 : i32
    scf.if %4 {
      %cst = arith.constant 0.000000e+00 : f32
      %8 = vector.broadcast %cst : f32 to vector<1x128xf32>
      %c0 = arith.constant 0 : index
      %c0_3 = arith.constant 0 : index
      %c0_4 = arith.constant 0 : index
      %9 = vector.load %arg6[%c0, %c0_3, %c0_4] : memref<1x1x128xf32, #tpu.memory_space<vmem>>, vector<1x1x128xf32>
      %10 = vector.shape_cast %9 : vector<1x1x128xf32> to vector<1x128xf32>
      %11 = vector.shape_cast %8 : vector<1x128xf32> to vector<1x1x128xf32>
      tpu.vector_store %arg6[%c0, %c0_3, %c0_4], %11 {strides = array<i32>} : memref<1x1x128xf32, #tpu.memory_space<vmem>>, vector<1x1x128xf32>,
      %cst_5 = arith.constant 0.000000e+00 : f32
      %12 = vector.broadcast %cst_5 : f32 to vector<1x128xf32>
      %c0_6 = arith.constant 0 : index
      %c0_7 = arith.constant 0 : index
      %c0_8 = arith.constant 0 : index
      %13 = vector.load %arg7[%c0_6, %c0_7, %c0_8] : memref<1x1x128xf32, #tpu.memory_space<vmem>>, vector<1x1x128xf32>
      %14 = vector.shape_cast %13 : vector<1x1x128xf32> to vector<1x128xf32>
      %15 = vector.shape_cast %12 : vector<1x128xf32> to vector<1x1x128xf32>
      tpu.vector_store %arg7[%c0_6, %c0_7, %c0_8], %15 {strides = array<i32>} : memref<1x1x128xf32, #tpu.memory_space<vmem>>, vector<1x1x128xf32>,
    } else {
    }
    %c1_i32_1 = arith.constant 1 : i32
    %5 = arith.cmpi slt, %1, %c1_i32_1 : i32
    %6 = arith.extui %5 : i1 to i32
    %c0_i32_2 = arith.constant 0 : i32
    %7 = arith.cmpi ne, %6, %c0_i32_2 : i32
    scf.if %7 {
      %c0 = arith.constant 0 : index
      %c0_3 = arith.constant 0 : index
      %8 = vector.load %arg2[%c0, %c0_3] : memref<2x128xf32, #tpu.memory_space<vmem>>, vector<2x128xf32>
      %c0_4 = arith.constant 0 : index
      %c0_5 = arith.constant 0 : index
      %9 = vector.load %arg3[%c0_4, %c0_5] : memref<2x128xf32, #tpu.memory_space<vmem>>, vector<2x128xf32>
      %c0_6 = arith.constant 0 : index
      %c0_7 = arith.constant 0 : index
      %10 = vector.load %arg4[%c0_6, %c0_7] : memref<2x128xf32, #tpu.memory_space<vmem>>, vector<2x128xf32>
      %c0_8 = arith.constant 0 : index
      %c0_9 = arith.constant 0 : index
      %11 = vector.load %arg5[%c0_8, %c0_9] : memref<2x128xf32, #tpu.memory_space<vmem>>, vector<2x128xf32>
      %cst = arith.constant -2.27338767 : f32
      %12 = vector.broadcast %cst : f32 to vector<2x128xf32>
      %13 = arith.addf %12, %9 : vector<2x128xf32>
      %cst_10 = arith.constant 0.000000e+00 : f32
      %14 = vector.broadcast %cst_10 : f32 to vector<2x128xf32>
      %15 = arith.maximumf %13, %14 : vector<2x128xf32>
      %16 = math.absf %13 : vector<2x128xf32>
      %cst_11 = arith.constant 0.000000e+00 : f32
      %17 = vector.broadcast %cst_11 : f32 to vector<2x128xf32>
      %18 = arith.subf %17, %16 : vector<2x128xf32>
      %19 = math.exp %18 : vector<2x128xf32>
      %20 = math.log1p %19 : vector<2x128xf32>
      %21 = arith.addf %15, %20 : vector<2x128xf32>
      %cst_12 = arith.constant 9.99999971E-10 : f32
      %22 = vector.broadcast %cst_12 : f32 to vector<2x128xf32>
      %23 = arith.addf %21, %22 : vector<2x128xf32>
      %24 = arith.mulf %23, %23 : vector<2x128xf32>
      %25 = arith.subf %10, %8 : vector<2x128xf32>
      %26 = math.absf %25 : vector<2x128xf32>
      %cst_13 = arith.constant 9.99999971E-10 : f32
      %27 = vector.broadcast %cst_13 : f32 to vector<2x128xf32>
      %28 = arith.addf %10, %27 : vector<2x128xf32>
      %29 = arith.divf %26, %28 : vector<2x128xf32>
      %30 = arith.subf %11, %24 : vector<2x128xf32>
      %31 = math.absf %30 : vector<2x128xf32>
      %cst_14 = arith.constant 9.99999971E-10 : f32
      %32 = vector.broadcast %cst_14 : f32 to vector<2x128xf32>
      %33 = arith.addf %11, %32 : vector<2x128xf32>
      %34 = arith.divf %31, %33 : vector<2x128xf32>
      %35 = tpu.iota {dimensions = array<i32: 0>} : vector<2x128xi32>
      %c2_i32 = arith.constant 2 : i32
      %36 = arith.muli %1, %c2_i32 : i32
      %37 = vector.broadcast %36 : i32 to vector<2x128xi32>
      %38 = arith.addi %37, %35 : vector<2x128xi32>
      %39 = tpu.iota {dimensions = array<i32: 1>} : vector<2x128xi32>
      %c128_i32 = arith.constant 128 : i32
      %40 = vector.broadcast %c128_i32 : i32 to vector<2x128xi32>
      %41 = arith.muli %38, %40 : vector<2x128xi32>
      %42 = arith.addi %41, %39 : vector<2x128xi32>
      %c200_i32 = arith.constant 200 : i32
      %43 = vector.broadcast %c200_i32 : i32 to vector<2x128xi32>
      %44 = arith.cmpi slt, %42, %43 : vector<2x128xi32>
      %cst_15 = arith.constant 0.000000e+00 : f32
      %45 = vector.broadcast %cst_15 : f32 to vector<2x128xf32>
      %46 = arith.select %44, %29, %45 : vector<2x128xi1>, vector<2x128xf32>
      %cst_16 = arith.constant 0.000000e+00 : f32
      %47 = vector.broadcast %cst_16 : f32 to vector<2x128xf32>
      %48 = arith.select %44, %34, %47 : vector<2x128xi1>, vector<2x128xf32>
      %cst_17 = arith.constant dense<0.000000e+00> : vector<128xf32>
      %49 = vector.multi_reduction <add>, %46, %cst_17 [0] : vector<2x128xf32> to vector<128xf32>
      %50 = vector.shape_cast %49 : vector<128xf32> to vector<1x128xf32>
      %cst_18 = arith.constant dense<0.000000e+00> : vector<128xf32>
      %51 = vector.multi_reduction <add>, %48, %cst_18 [0] : vector<2x128xf32> to vector<128xf32>
      %52 = vector.shape_cast %51 : vector<128xf32> to vector<1x128xf32>
      %c0_19 = arith.constant 0 : index
      %c0_20 = arith.constant 0 : index
      %c0_21 = arith.constant 0 : index
      %53 = vector.load %arg6[%c0_19, %c0_20, %c0_21] : memref<1x1x128xf32, #tpu.memory_space<vmem>>, vector<1x1x128xf32>
      %54 = vector.shape_cast %53 : vector<1x1x128xf32> to vector<1x128xf32>
      %55 = arith.addf %54, %50 : vector<1x128xf32>
      %c0_22 = arith.constant 0 : index
      %c0_23 = arith.constant 0 : index
      %c0_24 = arith.constant 0 : index
      %56 = vector.load %arg6[%c0_22, %c0_23, %c0_24] : memref<1x1x128xf32, #tpu.memory_space<vmem>>, vector<1x1x128xf32>
      %57 = vector.shape_cast %56 : vector<1x1x128xf32> to vector<1x128xf32>
      %58 = vector.shape_cast %55 : vector<1x128xf32> to vector<1x1x128xf32>
      tpu.vector_store %arg6[%c0_22, %c0_23, %c0_24], %58 {strides = array<i32>} : memref<1x1x128xf32, #tpu.memory_space<vmem>>, vector<1x1x128xf32>,
      %c0_25 = arith.constant 0 : index
      %c0_26 = arith.constant 0 : index
      %c0_27 = arith.constant 0 : index
      %59 = vector.load %arg7[%c0_25, %c0_26, %c0_27] : memref<1x1x128xf32, #tpu.memory_space<vmem>>, vector<1x1x128xf32>
      %60 = vector.shape_cast %59 : vector<1x1x128xf32> to vector<1x128xf32>
      %61 = arith.addf %60, %52 : vector<1x128xf32>
      %c0_28 = arith.constant 0 : index
      %c0_29 = arith.constant 0 : index
      %c0_30 = arith.constant 0 : index
      %62 = vector.load %arg7[%c0_28, %c0_29, %c0_30] : memref<1x1x128xf32, #tpu.memory_space<vmem>>, vector<1x1x128xf32>
      %63 = vector.shape_cast %62 : vector<1x1x128xf32> to vector<1x128xf32>
      %64 = vector.shape_cast %61 : vector<1x128xf32> to vector<1x1x128xf32>
      tpu.vector_store %arg7[%c0_28, %c0_29, %c0_30], %64 {strides = array<i32>} : memref<1x1x128xf32, #tpu.memory_space<vmem>>, vector<1x1x128xf32>,
    } else {
    }
    return
  }
  func.func @transform_0(%arg0: i32, %arg1: i32) -> (i32, i32) {
    %c1_i32 = arith.constant 1 : i32
    %0 = arith.muli %arg0, %c1_i32 : i32
    %1 = arith.addi %0, %arg1 : i32
    %c0_i32 = arith.constant 0 : i32
    %2 = arith.minsi %1, %c0_i32 : i32
    %c0_i32_0 = arith.constant 0 : i32
    %c0_i32_1 = arith.constant 0 : i32
    return %2, %c0_i32_0 : i32, i32
  }
  func.func @transform_1(%arg0: i32, %arg1: i32) -> (i32, i32) {
    %c1_i32 = arith.constant 1 : i32
    %0 = arith.muli %arg0, %c1_i32 : i32
    %1 = arith.addi %0, %arg1 : i32
    %c0_i32 = arith.constant 0 : i32
    %2 = arith.minsi %1, %c0_i32 : i32
    %c0_i32_0 = arith.constant 0 : i32
    %c0_i32_1 = arith.constant 0 : i32
    return %2, %c0_i32_0 : i32, i32
  }
  func.func @transform_2(%arg0: i32, %arg1: i32) -> (i32, i32) {
    %c1_i32 = arith.constant 1 : i32
    %0 = arith.muli %arg0, %c1_i32 : i32
    %1 = arith.addi %0, %arg1 : i32
    %c0_i32 = arith.constant 0 : i32
    %2 = arith.minsi %1, %c0_i32 : i32
    %c0_i32_0 = arith.constant 0 : i32
    %c0_i32_1 = arith.constant 0 : i32
    return %2, %c0_i32_0 : i32, i32
  }
  func.func @transform_3(%arg0: i32, %arg1: i32) -> (i32, i32) {
    %c1_i32 = arith.constant 1 : i32
    %0 = arith.muli %arg0, %c1_i32 : i32
    %1 = arith.addi %0, %arg1 : i32
    %c0_i32 = arith.constant 0 : i32
    %2 = arith.minsi %1, %c0_i32 : i32
    %c0_i32_0 = arith.constant 0 : i32
    %c0_i32_1 = arith.constant 0 : i32
    return %2, %c0_i32_0 : i32, i32
  }
  func.func @transform_4(%arg0: i32, %arg1: i32) -> (i32, i32, i32) {
    %c0_i32 = arith.constant 0 : i32
    %c0_i32_0 = arith.constant 0 : i32
    %c0_i32_1 = arith.constant 0 : i32
    return %arg0, %c0_i32, %c0_i32_0 : i32, i32, i32
  }
  func.func @transform_5(%arg0: i32, %arg1: i32) -> (i32, i32, i32) {
    %c0_i32 = arith.constant 0 : i32
    %c0_i32_0 = arith.constant 0 : i32
    %c0_i32_1 = arith.constant 0 : i32
    return %arg0, %c0_i32, %c0_i32_0 : i32, i32, i32
  }
}

</mosaic_0001>

<llo_original>
// kernel: mape.1
$region0: #{mape.1}
  #allocation0 [shape = 'u32[]', space=smem, size = 0x4, offset = 0x4, fixed_abs, tag = 'smem constant byte address 0x4 - core index']
  #allocation1 [shape = 'u32[144,128]{1,0:T(1,128)}', space=vmem, size = 0x12000, scoped, tag = 'internal scratch']
  %s0 = inlined_call_operand.vmem [shape: f32[2,128], index: 0, kind: input, shape index: {}]
  %s1 = inlined_call_operand.vmem [shape: f32[2,128], index: 1, kind: input, shape index: {}]
  %s2 = inlined_call_operand.vmem [shape: f32[2,128], index: 2, kind: input, shape index: {}]
  %s3 = inlined_call_operand.vmem [shape: f32[2,128], index: 3, kind: input, shape index: {}]
  %s4 = inlined_call_operand.vmem [shape: f32[1,1,128], index: 4, kind: output, shape index: {0}]
  %s5 = inlined_call_operand.vmem [shape: f32[1,1,128], index: 5, kind: output, shape index: {1}]
  %6 = xla_tuple %s4, %s5
  %s7 = sld [smem:[#allocation0]]
  $region42: #{mape.1} parent=0
    _
  %s9 = ssub.s32 1, %s7
  %s10 = scalar_select 0, %s9, %s7
  // Predicated region
  $region2: #{mape.1} parent=0 // pred_check
    _
  $region3: #{mape.1} parent=0 // pred_check_branch
    %12 = sbr.rel (0) target = $region5
  $region4: #{mape.1} parent=0 // pred_region
    %s13 = sadd.s32 0, 0
    %p14 = scmp.lt.s32.totalorder %s13, 0
    %s15 = scalar_select %p14, %s13, 0
    %p16 = scmp.lt.s32.totalorder %s15, 0
    %s17 = scalar_select %p16, %s15, 0
    %s18 = smul.addr %s17, 2
    %s19 = scalar_lea.vmem %s0, %s18
    %s20 = sadd.s32 0, 0
    %p21 = scmp.lt.s32.totalorder %s20, 0
    %s22 = scalar_select %p21, %s20, 0
  $region5: #{mape.1} parent=0 // pred_fallthru
    _
  // Predicated region
  $region6: #{mape.1} parent=0 // pred_check
    _
  $region7: #{mape.1} parent=0 // pred_check_branch
    %24 = sbr.rel (0) target = $region9
  $region8: #{mape.1} parent=0 // pred_region
    %s25 = sadd.s32 0, 0
    %p26 = scmp.lt.s32.totalorder %s25, 0
    %s27 = scalar_select %p26, %s25, 0
    %p28 = scmp.lt.s32.totalorder %s27, 0
    %s29 = scalar_select %p28, %s27, 0
    %s30 = smul.addr %s29, 2
    %s31 = scalar_lea.vmem %s1, %s30
    %s32 = sadd.s32 0, 0
    %p33 = scmp.lt.s32.totalorder %s32, 0
    %s34 = scalar_select %p33, %s32, 0
  $region9: #{mape.1} parent=0 // pred_fallthru
    _
  // Predicated region
  $region10: #{mape.1} parent=0 // pred_check
    _
  $region11: #{mape.1} parent=0 // pred_check_branch
    %36 = sbr.rel (0) target = $region13
  $region12: #{mape.1} parent=0 // pred_region
    %s37 = sadd.s32 0, 0
    %p38 = scmp.lt.s32.totalorder %s37, 0
    %s39 = scalar_select %p38, %s37, 0
    %p40 = scmp.lt.s32.totalorder %s39, 0
    %s41 = scalar_select %p40, %s39, 0
    %s42 = smul.addr %s41, 2
    %s43 = scalar_lea.vmem %s2, %s42
    %s44 = sadd.s32 0, 0
    %p45 = scmp.lt.s32.totalorder %s44, 0
    %s46 = scalar_select %p45, %s44, 0
  $region13: #{mape.1} parent=0 // pred_fallthru
    _
  // Predicated region
  $region14: #{mape.1} parent=0 // pred_check
    _
  $region15: #{mape.1} parent=0 // pred_check_branch
    %48 = sbr.rel (0) target = $region17
  $region16: #{mape.1} parent=0 // pred_region
    %s49 = sadd.s32 0, 0
    %p50 = scmp.lt.s32.totalorder %s49, 0
    %s51 = scalar_select %p50, %s49, 0
    %p52 = scmp.lt.s32.totalorder %s51, 0
    %s53 = scalar_select %p52, %s51, 0
    %s54 = smul.addr %s53, 2
    %s55 = scalar_lea.vmem %s3, %s54
    %s56 = sadd.s32 0, 0
    %p57 = scmp.lt.s32.totalorder %s56, 0
    %s58 = scalar_select %p57, %s56, 0
  $region17: #{mape.1} parent=0 // pred_fallthru
    _
  %s59 = sadd.s32 0, 0
  %p60 = scmp.lt.s32.totalorder %s59, 0
  %s61 = scalar_select %p60, %s59, 0
  %p62 = scmp.lt.s32.totalorder %s61, 0
  %s63 = scalar_select %p62, %s61, 0
  %s64 = smul.addr %s63, 2
  %s65 = scalar_lea.vmem %s0, %s64
  %s66 = sadd.s32 0, 0
  %p67 = scmp.lt.s32.totalorder %s66, 0
  %s68 = scalar_select %p67, %s66, 0
  %p69 = scmp.lt.s32.totalorder %s68, 0
  %s70 = scalar_select %p69, %s68, 0
  %s71 = smul.addr %s70, 2
  %s72 = scalar_lea.vmem %s1, %s71
  %s73 = sadd.s32 0, 0
  %p74 = scmp.lt.s32.totalorder %s73, 0
  %s75 = scalar_select %p74, %s73, 0
  %p76 = scmp.lt.s32.totalorder %s75, 0
  %s77 = scalar_select %p76, %s75, 0
  %s78 = smul.addr %s77, 2
  %s79 = scalar_lea.vmem %s2, %s78
  %s80 = sadd.s32 0, 0
  %p81 = scmp.lt.s32.totalorder %s80, 0
  %s82 = scalar_select %p81, %s80, 0
  %p83 = scmp.lt.s32.totalorder %s82, 0
  %s84 = scalar_select %p83, %s82, 0
  %s85 = smul.addr %s84, 2
  %s86 = scalar_lea.vmem %s3, %s85
  %s87 = sadd.s32 0, 0
  %p88 = scmp.lt.s32.totalorder %s87, 0
  %s89 = scalar_select %p88, %s87, 0
  %p90 = scmp.lt.s32.totalorder %s89, 0
  %s91 = scalar_select %p90, %s89, 0
  %s92 = smul.addr %s91, 2
  %s93 = scalar_lea.vmem %s0, %s92
  %s94 = sadd.s32 0, 0
  %p95 = scmp.lt.s32.totalorder %s94, 0
  %s96 = scalar_select %p95, %s94, 0
  %s97 = sadd.s32 0, 0
  %p98 = scmp.lt.s32.totalorder %s97, 0
  %s99 = scalar_select %p98, %s97, 0
  %p100 = scmp.lt.s32.totalorder %s99, 0
  %s101 = scalar_select %p100, %s99, 0
  %s102 = smul.addr %s101, 2
  %s103 = scalar_lea.vmem %s1, %s102
  %s104 = sadd.s32 0, 0
  %p105 = scmp.lt.s32.totalorder %s104, 0
  %s106 = scalar_select %p105, %s104, 0
  %s107 = sadd.s32 0, 0
  %p108 = scmp.lt.s32.totalorder %s107, 0
  %s109 = scalar_select %p108, %s107, 0
  %p110 = scmp.lt.s32.totalorder %s109, 0
  %s111 = scalar_select %p110, %s109, 0
  %s112 = smul.addr %s111, 2
  %s113 = scalar_lea.vmem %s2, %s112
  %s114 = sadd.s32 0, 0
  %p115 = scmp.lt.s32.totalorder %s114, 0
  %s116 = scalar_select %p115, %s114, 0
  %s117 = sadd.s32 0, 0
  %p118 = scmp.lt.s32.totalorder %s117, 0
  %s119 = scalar_select %p118, %s117, 0
  %p120 = scmp.lt.s32.totalorder %s119, 0
  %s121 = scalar_select %p120, %s119, 0
  %s122 = smul.addr %s121, 2
  %s123 = scalar_lea.vmem %s3, %s122
  %s124 = sadd.s32 0, 0
  %p125 = scmp.lt.s32.totalorder %s124, 0
  %s126 = scalar_select %p125, %s124, 0
  %s127 = sadd.s32 0, 0
  %p128 = scmp.eq.s32.totalorder 0, 0
  // Predicated region
  $region18: #{mape.1} parent=0 // pred_check
    %p129 = pneg %p128
  $region19: #{mape.1} parent=0 // pred_check_branch
    %131 = sbr.rel (%p129) target = $region21
  $region20: #{mape.1} parent=0 // pred_region
    %132 = vst [vmem:[%s4] sm:$0x1] 0.0
    %133 = vst [vmem:[%s5] sm:$0x1] 0.0
  $region21: #{mape.1} parent=0 // pred_fallthru
    _
  %p134 = scmp.lt.s32.totalorder %s127, 1
  // Predicated region
  $region22: #{mape.1} parent=0 // pred_check
    %p135 = pneg %p134
  $region23: #{mape.1} parent=0 // pred_check_branch
    %137 = sbr.rel (%p135) target = $region25
  $region24: #{mape.1} parent=0 // pred_region
    %v138 = vld [vmem:[%s93] sm:$0x3]
    %v139 = vld [vmem:[%s103] sm:$0x3]
    %v140 = vld [vmem:[%s113] sm:$0x3]
    %v141 = vld [vmem:[%s123] sm:$0x3]
    %v142 = vadd.f32 %v139, -2.2733877
    %v143 = vmax.f32 %v142, 0.0
    %v144 = vand.u32 2147483647, %v142
    %v145 = vsub.f32 0.0, %v144
    %v146 = vmul.f32 %v145, 1.442695
    %v147 = vpow.pop %v146
    %v148 = vadd.f32 %v147, 1.0
    %v149 = vlog2.pop %v148
    %v150 = vmul.f32 %v149, 0.6931472
    %v151 = vmul.f32 -0.5, %v147
    %v152 = vadd.f32 %v151, 1.0
    %v153 = vmul.f32 %v152, %v147
    %v154 = vand.u32 2147483647, %v147
    %vm155 = vcmp.lt.f32.partialorder %v154, 0.0004427343
    %v156 = vsel %vm155, %v153, %v150
    %v157 = vadd.f32 %v143, %v156
    %v158 = vadd.f32 %v157, 1e-09
    %v159 = vmul.f32 %v158, %v158
    %v160 = vsub.f32 %v140, %v138
    %v161 = vand.u32 2147483647, %v160
    %v162 = vadd.f32 %v140, 1e-09
    %v163 = vrcp.pop %v162
    %v164 = vmul.f32 %v161, %v163
    %v165 = vsub.f32 %v141, %v159
    %v166 = vand.u32 2147483647, %v165
    %v167 = vadd.f32 %v141, 1e-09
    %v168 = vrcp.pop %v167
    %v169 = vmul.f32 %v166, %v168
    %v170 = vlaneseq
    %v171 = vshrl.u32 %v170, 7
    %s172 = smul.u32 %s127, 2
    %v173 = vstv %s172
    %v174 = vadd.s32 %v173, %v171
    %v175 = vlaneseq
    %v176 = vand.u32 %v175, 127
    %v177 = vmul.u32 %v174, 128
    %v178 = vadd.s32 %v177, %v176
    %vm179 = vcmp.lt.s32.totalorder %v178, 200
    %v180 = vsel %vm179, %v164, 0.0
    %v181 = vsel %vm179, %v169, 0.0
    %vm182 = vcmask 1041408
    %v183 = vsel %vm182, %v180, 0.0
    %v184 = vrot.slane %v183, 4
    %v185 = vadd.f32 %v183, %v184
    %v186 = vrot.slane %v185, 2
    %v187 = vadd.f32 %v185, %v186
    %v188 = vrot.slane %v187, 1
    %v189 = vadd.f32 %v187, %v188
    %v190 = vsel %vm182, %v181, 0.0
    %v191 = vrot.slane %v190, 4
    %v192 = vadd.f32 %v190, %v191
    %v193 = vrot.slane %v192, 2
    %v194 = vadd.f32 %v192, %v193
    %v195 = vrot.slane %v194, 1
    %v196 = vadd.f32 %v194, %v195
    %v197 = vld [vmem:[%s4] sm:$0x1]
    %v198 = vadd.f32 %v197, %v189
    %199 = vst [vmem:[%s4] sm:$0x1] %v198
    %v200 = vld [vmem:[%s5] sm:$0x1]
    %v201 = vadd.f32 %v200, %v196
    %202 = vst [vmem:[%s5] sm:$0x1] %v201
  $region25: #{mape.1} parent=0 // pred_fallthru
    _
  // Predicated region
  $region26: #{mape.1} parent=0 // pred_check
    _
  $region27: #{mape.1} parent=0 // pred_check_branch
    %204 = sbr.rel (0) target = $region29
  $region28: #{mape.1} parent=0 // pred_region
    _
  $region29: #{mape.1} parent=0 // pred_fallthru
    _
  // Predicated region
  $region30: #{mape.1} parent=0 // pred_check
    _
  $region31: #{mape.1} parent=0 // pred_check_branch
    %206 = sbr.rel (0) target = $region33
  $region32: #{mape.1} parent=0 // pred_region
    _
  $region33: #{mape.1} parent=0 // pred_fallthru
    _
  // Predicated region
  $region34: #{mape.1} parent=0 // pred_check
    _
  $region35: #{mape.1} parent=0 // pred_check_branch
    %208 = sbr.rel (0) target = $region37
  $region36: #{mape.1} parent=0 // pred_region
    _
  $region37: #{mape.1} parent=0 // pred_fallthru
    _
  // Predicated region
  $region38: #{mape.1} parent=0 // pred_check
    _
  $region39: #{mape.1} parent=0 // pred_check_branch
    %210 = sbr.rel (0) target = $region41
  $region40: #{mape.1} parent=0 // pred_region
    _
  $region41: #{mape.1} parent=0 // pred_fallthru
    _

</llo_original>
